<compile_context>
chip_gen: v6e
topology: v6e:2x2x1
jax: 0.10.0
libtpu: 0.0.40
codegen_flags: <defaults>
</compile_context>

<pallas_src>
import functools
import math

import jax
import jax.numpy as jnp
from jax import lax
from jax.experimental import pallas as pl
from jax.experimental.pallas import tpu as pltpu


_SUB_ROWS = 128        # in-kernel row sub-chunk: bounds live vregs with grouped stores
_MAX_TILE_ROWS = 1024  # measured tile-size curve: >512-1024 rows gives <2%
_MIN_GRID_STEPS = 8    # keep the pipeline busy and both v7x TensorCores fed


def _sincos_kernel(x_ref, o_ref, *, num_bands: int, d: int, sub_rows: int, group: int):
    """One row-tile of the sin/cos band expansion.

    x_ref : [TR, D]               (VMEM)
    o_ref : [TR, D*(1+2*nb)]      (VMEM)

    The block is processed in `sub_rows`-row sub-chunks so that, even for tall
    tiles, only a handful of (sub_rows, D) band pieces are live at once.
    """
    out_dtype = o_ref.dtype
    tr = x_ref.shape[0]
    nsub = tr // sub_rows  # static; tr is a multiple of sub_rows by construction

    def process(r0):
        rows = pl.ds(r0, sub_rows)
        x = x_ref[rows, :]                       # identity band: original dtype, no casts
        xf = x.astype(jnp.float32)

        # Exactly two transcendental evaluations; every higher band comes from
        # the double-angle recurrence (pure VPU mul/add).
        s = jnp.sin(xf)
        c = jnp.cos(xf)

        pieces = [x]                             # [x, sin(x), cos(x), sin(2x), cos(2x), ...]
        for i in range(num_bands):               # unrolled at trace time (static)
            pieces.append(s.astype(out_dtype))
            pieces.append(c.astype(out_dtype))
            if i + 1 < num_bands:
                s, c = 2.0 * s * c, 2.0 * c * c - 1.0

        # Lane-aligned grouped stores: assemble `group` adjacent band pieces
        # into one chunk so stores cover full 128-lane vregs (the output is
        # (1+2B)x the input bytes, so the vector-store slot matters).
        lo = 0
        for start in range(0, len(pieces), group):
            chunk = pieces[start:start + group]
            width = d * len(chunk)
            val = chunk[0] if len(chunk) == 1 else jnp.concatenate(chunk, axis=-1)
            o_ref[rows, lo:lo + width] = val
            lo += width

    if nsub == 1:
        process(0)
    else:
        def body(j, carry):
            process(pl.multiple_of(j * sub_rows, sub_rows))
            return carry
        lax.fori_loop(0, nsub, body, 0)


def _round_up(n: int, m: int) -> int:
    return ((n + m - 1) // m) * m


def _sublane_multiple(itemsize: int) -> int:
    # f32 -> 8, bf16/f16 -> 16, int8/fp8 -> 32.
    return {4: 8, 2: 16, 1: 32}.get(itemsize, 8)


def _pick_tile_rows(rows: int, d: int, out_d: int, itemsize: int, sublane: int):
    """Row-tile and in-kernel sub-chunk sizes.

    - double-buffered in+out tiles stay under ~12 MiB (fits the 32 MiB scoped
      VMEM on v5e/v6e/v7x with headroom for compiler scratch),
    - at least _MIN_GRID_STEPS grid steps when rows allow it,
    - never more than _MAX_TILE_ROWS rows per tile,
    - tiles taller than _SUB_ROWS are a multiple of _SUB_ROWS (in-kernel loop).
    """
    budget_bytes = 12 * 1024 * 1024
    per_row = 2 * (d + out_d) * itemsize                     # in + out, double-buffered
    tr_budget = max(sublane, (budget_bytes // per_row) // sublane * sublane)
    tr_steps = _round_up(max(1, -(-rows // _MIN_GRID_STEPS)), sublane)
    tr = max(sublane, min(tr_budget, _MAX_TILE_ROWS, tr_steps))
    if tr > _SUB_ROWS:
        tr = max(_SUB_ROWS, (tr // _SUB_ROWS) * _SUB_ROWS)   # multiple of sub-chunk
        sub_rows = _SUB_ROWS
    else:
        sub_rows = tr
    return tr, sub_rows


def positional_encoding_sincos(x: jax.Array, num_bands: int) -> jax.Array:
    """JAX wrapper: flatten leading dims, run the tiled Pallas kernel, reshape back."""
    orig_shape = x.shape
    d = orig_shape[-1]
    rows = int(math.prod(orig_shape[:-1])) if len(orig_shape) > 1 else 1
    out_d = d * (1 + 2 * num_bands)

    itemsize = jnp.dtype(x.dtype).itemsize
    sublane = _sublane_multiple(itemsize)

    x2d = x.reshape(rows, d)

    tr, sub_rows = _pick_tile_rows(rows, d, out_d, itemsize, sublane)
    grid = (pl.cdiv(rows, tr),)          # ragged last block handled by Pallas (no pad/slice)

    # Band-group size for lane-aligned stores: with D < 128 and D | 128, a group
    # of 128//D adjacent bands fills a full 128-lane chunk.
    group = (128 // d) if (d < 128 and 128 % d == 0) else 1

    kernel = functools.partial(
        _sincos_kernel, num_bands=num_bands, d=d, sub_rows=sub_rows, group=group)

    # Advisory estimate for XLA's scheduler.  sin/cos lower to VPU range
    # reduction + polynomial (~30 ops each); higher bands cost 4 VPU ops via the
    # double-angle recurrence; casts ~1 op per stored element.
    poly_ops = 30
    flops = rows * d * (2 * poly_ops + 4 * max(num_bands - 1, 0) + 2 * num_bands)
    cost = pl.CostEstimate(
        flops=flops,
        transcendentals=2 * rows * d,                       # one sin + one cos per element
        bytes_accessed=rows * (d + out_d) * itemsize,       # ragged blocks are clamped, not padded
    )

    out2d = pl.pallas_call(
        kernel,
        out_shape=jax.ShapeDtypeStruct((rows, out_d), x.dtype),
        grid=grid,
        in_specs=[pl.BlockSpec((tr, d), lambda i: (i, 0))],
        out_specs=pl.BlockSpec((tr, out_d), lambda i: (i, 0)),
        compiler_params=pltpu.CompilerParams(
            dimension_semantics=("parallel",),              # rows are independent (v7x 2-TC)
            vmem_limit_bytes=32 * 1024 * 1024,              # safe on v5e/v6e/v7x; tiles use ~12 MiB
        ),
        cost_estimate=cost,
    )(x2d)

    return out2d.reshape(*orig_shape[:-1], out_d)


def _reference_sincos(x: jnp.ndarray, num_bands: int) -> jnp.ndarray:
    fns = [x]
    for i in range(num_bands):
        fns.append(jnp.sin((2 ** i) * x))
        fns.append(jnp.cos((2 ** i) * x))
    return jnp.concatenate(fns, axis=-1)


if __name__ == "__main__":
    key = jax.random.PRNGKey(0)
    num_bands = 4

    # Check 1: small shapes consistent with the module: batch=2, seq=8, hidden=32.
    B, S, D = 2, 8, 32
    x = jax.random.normal(key, (B, S, D), dtype=jnp.float32)
    out = jax.block_until_ready(positional_encoding_sincos(x, num_bands))
    ref = _reference_sincos(x, num_bands)
    assert out.shape == (B, S, D * (1 + 2 * num_bands)), out.shape
    # Double-angle recurrence compounds rounding ~linearly with band index; at
    # num_bands=4 in f32 the error stays well below 5e-5.
    assert jnp.allclose(out, ref, atol=5e-5, rtol=1e-5), "mismatch vs reference (f32)"

    # Check 2: ragged row count (not a sublane/tile multiple) and bf16 input
    # (exercises ragged-last-block masking and the f32-compute / cast-on-store path).
    key2 = jax.random.PRNGKey(1)
    x2 = jax.random.normal(key2, (3, 7, 32), dtype=jnp.bfloat16)
    out2 = jax.block_until_ready(positional_encoding_sincos(x2, num_bands))
    ref2 = _reference_sincos(x2.astype(jnp.float32), num_bands)
    assert out2.shape == (3, 7, 32 * (1 + 2 * num_bands)), out2.shape
    assert jnp.allclose(out2.astype(jnp.float32), ref2, atol=2e-2, rtol=2e-2), \
        "mismatch vs reference (bf16)"

    # Check 3: taller input -> multiple grid steps, in-kernel sub-chunk loop and
    # a ragged last grid block are all exercised.
    key3 = jax.random.PRNGKey(2)
    x3 = jax.random.normal(key3, (4, 500, 32), dtype=jnp.float32)
    out3 = jax.block_until_ready(positional_encoding_sincos(x3, num_bands))
    ref3 = _reference_sincos(x3, num_bands)
    assert out3.shape == (4, 500, 32 * (1 + 2 * num_bands)), out3.shape
    assert jnp.allclose(out3, ref3, atol=5e-5, rtol=1e-5), "mismatch vs reference (tall f32)"

    print("KERNEL_OK")
</pallas_src>

<mosaic_0001>
module attributes {stable_mosaic.version = 11 : i64} {
  func.func @_sincos_kernel(%arg0: i32, %arg1: memref<8x32xf32, #tpu.memory_space<vmem>>, %arg2: memref<8x288xf32, #tpu.memory_space<vmem>>) attributes {dimension_semantics = [#tpu.dimension_semantics<parallel>], iteration_bounds = array<i64: 2>, scalar_prefetch = 0 : i64, scratch_operands = 0 : i64, tpu.core_type = #tpu.core_type<tc>, window_params = [{transform_indices = @transform_0, window_bounds = array<i64: 8, 32>}, {transform_indices = @transform_1, window_bounds = array<i64: 8, 288>}]} {
    %c0 = arith.constant 0 : index
    %c0_0 = arith.constant 0 : index
    %0 = vector.load %arg1[%c0, %c0_0] : memref<8x32xf32, #tpu.memory_space<vmem>>, vector<8x32xf32>
    %1 = math.sin %0 : vector<8x32xf32>
    %2 = math.cos %0 : vector<8x32xf32>
    %cst = arith.constant 2.000000e+00 : f32
    %3 = vector.broadcast %cst : f32 to vector<8x32xf32>
    %4 = arith.mulf %3, %1 : vector<8x32xf32>
    %5 = arith.mulf %4, %2 : vector<8x32xf32>
    %cst_1 = arith.constant 2.000000e+00 : f32
    %6 = vector.broadcast %cst_1 : f32 to vector<8x32xf32>
    %7 = arith.mulf %6, %2 : vector<8x32xf32>
    %8 = arith.mulf %7, %2 : vector<8x32xf32>
    %cst_2 = arith.constant 1.000000e+00 : f32
    %9 = vector.broadcast %cst_2 : f32 to vector<8x32xf32>
    %10 = arith.subf %8, %9 : vector<8x32xf32>
    %cst_3 = arith.constant 2.000000e+00 : f32
    %11 = vector.broadcast %cst_3 : f32 to vector<8x32xf32>
    %12 = arith.mulf %11, %5 : vector<8x32xf32>
    %13 = arith.mulf %12, %10 : vector<8x32xf32>
    %cst_4 = arith.constant 2.000000e+00 : f32
    %14 = vector.broadcast %cst_4 : f32 to vector<8x32xf32>
    %15 = arith.mulf %14, %10 : vector<8x32xf32>
    %16 = arith.mulf %15, %10 : vector<8x32xf32>
    %cst_5 = arith.constant 1.000000e+00 : f32
    %17 = vector.broadcast %cst_5 : f32 to vector<8x32xf32>
    %18 = arith.subf %16, %17 : vector<8x32xf32>
    %cst_6 = arith.constant 2.000000e+00 : f32
    %19 = vector.broadcast %cst_6 : f32 to vector<8x32xf32>
    %20 = arith.mulf %19, %13 : vector<8x32xf32>
    %21 = arith.mulf %20, %18 : vector<8x32xf32>
    %cst_7 = arith.constant 2.000000e+00 : f32
    %22 = vector.broadcast %cst_7 : f32 to vector<8x32xf32>
    %23 = arith.mulf %22, %18 : vector<8x32xf32>
    %24 = arith.mulf %23, %18 : vector<8x32xf32>
    %cst_8 = arith.constant 1.000000e+00 : f32
    %25 = vector.broadcast %cst_8 : f32 to vector<8x32xf32>
    %26 = arith.subf %24, %25 : vector<8x32xf32>
    %27 = tpu.concatenate %0, %1, %2, %5 in 1 : vector<8x32xf32>, vector<8x32xf32>, vector<8x32xf32>, vector<8x32xf32> -> vector<8x128xf32>
    %c0_9 = arith.constant 0 : index
    %c0_10 = arith.constant 0 : index
    %28 = vector.load %arg2[%c0_9, %c0_10] : memref<8x288xf32, #tpu.memory_space<vmem>>, vector<8x128xf32>
    tpu.vector_store %arg2[%c0_9, %c0_10], %27 {strides = array<i32>} : memref<8x288xf32, #tpu.memory_space<vmem>>, vector<8x128xf32>,
    %29 = tpu.concatenate %10, %13, %18, %21 in 1 : vector<8x32xf32>, vector<8x32xf32>, vector<8x32xf32>, vector<8x32xf32> -> vector<8x128xf32>
    %c0_11 = arith.constant 0 : index
    %c128 = arith.constant 128 : index
    %30 = vector.load %arg2[%c0_11, %c128] : memref<8x288xf32, #tpu.memory_space<vmem>>, vector<8x128xf32>
    tpu.vector_store %arg2[%c0_11, %c128], %29 {strides = array<i32>} : memref<8x288xf32, #tpu.memory_space<vmem>>, vector<8x128xf32>,
    %c0_12 = arith.constant 0 : index
    %c256 = arith.constant 256 : index
    %31 = vector.load %arg2[%c0_12, %c256] : memref<8x288xf32, #tpu.memory_space<vmem>>, vector<8x32xf32>
    tpu.vector_store %arg2[%c0_12, %c256], %26 {strides = array<i32>} : memref<8x288xf32, #tpu.memory_space<vmem>>, vector<8x32xf32>,
    return
  }
  func.func @transform_0(%arg0: i32) -> (i32, i32) {
    %c0_i32 = arith.constant 0 : i32
    %c0_i32_0 = arith.constant 0 : i32
    return %arg0, %c0_i32 : i32, i32
  }
  func.func @transform_1(%arg0: i32) -> (i32, i32) {
    %c0_i32 = arith.constant 0 : i32
    %c0_i32_0 = arith.constant 0 : i32
    return %arg0, %c0_i32 : i32, i32
  }
}

</mosaic_0001>

<llo_original>
// kernel: tpu_custom_call.1
$region0: #{tpu_custom_call.1}
  #allocation0 [shape = 'u32[]', space=smem, size = 0x4, offset = 0x4, fixed_abs, tag = 'smem constant byte address 0x4 - core index']
  #allocation1 [shape = 'u32[144,128]{1,0:T(1,128)}', space=vmem, size = 0x12000, scoped, tag = 'internal scratch']
  %s0 = inlined_call_operand.hbm [shape: f32[16,32], index: 0, kind: input, shape index: {}]
  %s1 = inlined_call_operand.hbm [shape: f32[16,288], index: 1, kind: output, shape index: {}]
  %s2 = sld [smem:[#allocation0]]
  $region41: #{tpu_custom_call.1} parent=0
    _
  %s4 = ssub.s32 1, %s2
  %s5 = scalar_select 0, %s4, %s2
  $region1: #{tpu_custom_call.1} parent=0
    #allocation2 [shape = 'u8[8192]{0}', space=vmem, size = 0x2000, scoped, tag = 'input window, operand 0']
    #allocation3 [shape = 's32[2]{0}', space=sflag, size = 0x8, scoped, tag = 'scoped memory for tpu_custom_call.1']
    #allocation4 [shape = 's32[2]{0}', space=sflag, size = 0x8, scoped, tag = 'scoped memory for tpu_custom_call.1']
    #allocation5 [shape = 'u8[24576]{0}', space=vmem, size = 0x6000, scoped, tag = 'output window, operand 0']
    %6 = vsyncpa [#allocation3], 0
    %s7 = scalar_lea.sflag [#allocation3], 1
    %8 = vsyncpa %s7, 0
    %9 = vsyncpa [#allocation4], 0
    %s10 = scalar_lea.sflag [#allocation4], 1
    %11 = vsyncpa %s10, 0
    loop: start=0, step=1, limit=4
    $region2: #{tpu_custom_call.1} parent=1 // loop_pre_header
      _
    $region3: #{tpu_custom_call.1} parent=1 // loop_header
      %s13 = sphi 0, %s17
      %p14 = scmp.ge.s32.totalorder %s13, 4
      %s23 = sphi 0, %s25
      %s26 = sphi 0, %s23
      %s27 = sphi 0, %s26
      %s43 = sphi 0, %s27
      %s49 = sphi 0, %s51
      %s52 = sphi 0, %s49
      %s53 = sphi 0, %s52
      %s69 = sphi 0, %s53
    $region4: #{tpu_custom_call.1} parent=1 // loop_header_branch
      %16 = sbr.rel (%p14) target = $region8
    $region5: #{tpu_custom_call.1} parent=1 // loop_body
      %s18 = ssub.s32 %s13, 1
      %s19 = ssub.s32 %s13, 2
      %s20 = sadd.s32 %s13, 1
      %s21 = ssub.s32 %s13, %s20
      %p22 = scmp.eq.s32.totalorder %s21, 0
      %s24 = sadd.s32 %s23, 1
      %s25 = scalar_select %p22, %s23, %s24
      %p28 = pneg %p22
      %p29 = scmp.eq.s32.totalorder %s13, 1
      %p30 = por %p28, %p29
      %p31 = scmp.ne.s32.totalorder %s23, %s26
      %p32 = scmp.eq.s32.totalorder %s13, 0
      %p33 = por %p31, %p32
      %p34 = scmp.ne.s32.totalorder %s23, %s26
      %p35 = scmp.eq.s32.totalorder %s18, 1
      %p36 = por %p34, %p35
      %p37 = scmp.ne.s32.totalorder %s26, %s27
      %p38 = scmp.eq.s32.totalorder %s18, 0
      %p39 = por %p37, %p38
      %p40 = scmp.ne.s32.totalorder %s26, %s27
      %p41 = scmp.eq.s32.totalorder %s19, 1
      %p42 = por %p40, %p41
      %p44 = scmp.ne.s32.totalorder %s27, %s43
      %p45 = scmp.eq.s32.totalorder %s19, 0
      %p46 = por %p44, %p45
      %s47 = ssub.s32 %s13, %s20
      %p48 = scmp.eq.s32.totalorder %s47, 0
      %s50 = sadd.s32 %s49, 1
      %s51 = scalar_select %p48, %s49, %s50
      %p54 = pneg %p48
      %p55 = scmp.eq.s32.totalorder %s13, 1
      %p56 = por %p54, %p55
      %p57 = scmp.ne.s32.totalorder %s49, %s52
      %p58 = scmp.eq.s32.totalorder %s13, 0
      %p59 = por %p57, %p58
      %p60 = scmp.ne.s32.totalorder %s49, %s52
      %p61 = scmp.eq.s32.totalorder %s18, 1
      %p62 = por %p60, %p61
      %p63 = scmp.ne.s32.totalorder %s52, %s53
      %p64 = scmp.eq.s32.totalorder %s18, 0
      %p65 = por %p63, %p64
      %p66 = scmp.ne.s32.totalorder %s52, %s53
      %p67 = scmp.eq.s32.totalorder %s19, 1
      %p68 = por %p66, %p67
      %p70 = scmp.ne.s32.totalorder %s53, %s69
      %p71 = scmp.eq.s32.totalorder %s19, 0
      %p72 = por %p70, %p71
      %p73 = scmp.le.s32.totalorder 1, %s13
      %p74 = scmp.lt.s32.totalorder %s13, 3
      %p75 = pnand %p73, %p74
      %p76 = pneg %p75
      // Predicated region
      $region9: #{tpu_custom_call.1} parent=5 // pred_check
        _
      $region10: #{tpu_custom_call.1} parent=5 // pred_check_branch
        %78 = sbr.rel (%p75) target = $region12
      $region11: #{tpu_custom_call.1} parent=5 // pred_region
        %s79 = ssub.s32 %s13, 1
      $region12: #{tpu_custom_call.1} parent=5 // pred_fallthru
        _
      %p80 = scmp.lt.s32.totalorder %s13, 2
      // Predicated region
      $region13: #{tpu_custom_call.1} parent=5 // pred_check
        %p81 = pneg %p80
      $region14: #{tpu_custom_call.1} parent=5 // pred_check_branch
        %83 = sbr.rel (%p81) target = $region16
      $region15: #{tpu_custom_call.1} parent=5 // pred_region
        // Predicated region
        $region17: #{tpu_custom_call.1} parent=15 // pred_check
          %p84 = pneg %p33
        $region18: #{tpu_custom_call.1} parent=15 // pred_check_branch
          %86 = sbr.rel (%p84) target = $region20
        $region19: #{tpu_custom_call.1} parent=15 // pred_region
          %s87 = sand.u32 %s23, 1
          %s88 = scalar_lea.sflag [#allocation3], %s87
          %s89 = sand.u32 %s23, 1
          %s90 = smul.addr %s89, 8
          %s91 = scalar_lea.vmem [#allocation2], %s90
          %s93 = ssub.s32 128, 128
          %94 = vsyncadd %s88, %s93
          %s95 = smul.addr %s13, 128
          %s96 = scalar_lea.hbm %s0, %s95
          %s98 = sshll.u32 %s91, 4
          %s99 = int_to_ptr.vmem [resolvable:$true] %s98
          %101 = dma.hbm_to_vmem [thread:$0]  %s96, 128, %s99, %s88
        $region20: #{tpu_custom_call.1} parent=15 // pred_fallthru
          _
      $region16: #{tpu_custom_call.1} parent=5 // pred_fallthru
        _
      %p102 = scmp.le.s32.totalorder 1, %s13
      %p103 = scmp.lt.s32.totalorder %s13, 3
      %p104 = pnand %p102, %p103
      %p105 = pneg %p104
      // Predicated region
      $region21: #{tpu_custom_call.1} parent=5 // pred_check
        _
      $region22: #{tpu_custom_call.1} parent=5 // pred_check_branch
        %107 = sbr.rel (%p104) target = $region24
      $region23: #{tpu_custom_call.1} parent=5 // pred_region
        %s108 = ssub.s32 %s13, 1
        %s109 = sand.u32 %s26, 1
        %s110 = scalar_lea.sflag [#allocation3], %s109
        %s111 = sand.u32 %s26, 1
        %s112 = smul.addr %s111, 8
        %s113 = scalar_lea.vmem [#allocation2], %s112
        // Predicated region
        $region25: #{tpu_custom_call.1} parent=23 // pred_check
          %p114 = pneg %p39
        $region26: #{tpu_custom_call.1} parent=23 // pred_check_branch
          %116 = sbr.rel (%p114) target = $region28
        $region27: #{tpu_custom_call.1} parent=23 // pred_region
          %117 = dma.done %s110, 128
        $region28: #{tpu_custom_call.1} parent=23 // pred_fallthru
          _
        %s118 = sand.u32 %s26, 1
        %s119 = scalar_lea.sflag [#allocation3], %s118
        %s120 = sand.u32 %s26, 1
        %s121 = smul.addr %s120, 8
        %s122 = scalar_lea.vmem [#allocation2], %s121
        %p123 = pneg %p39
        %p124 = pneg %p36
        %p125 = pneg %p65
        %p126 = pneg %p62
        %s127 = sand.u32 %s52, 1
        %s128 = scalar_lea.sflag [#allocation4], %s127
        %s129 = sand.u32 %s52, 1
        %s130 = smul.addr %s129, 24
        %s131 = scalar_lea.vmem [#allocation5], %s130
        %v132 = vld [vmem:[%s113] sm:$0xff]
        %v133 = vand.u32 2147483647, %v132
        %vm134 = vcmp.le.f32.partialorder %v133, 0.7853982
        %vm135 = vcmp.lt.s32.totalorder %v132, 0
        %v136 = vand.u32 %v132, 2139095040
        %v137 = vshrl.u32 %v136, 23
        %v138 = vsub.s32 %v137, 127
        %v139 = vand.u32 2147483647, %v132
        %v140 = vand.u32 %v139, 8388607
        %v141 = vor.u32 %v140, 8388608
        %v142 = vsub.s32 0, %v141
        %v143 = vadd.s32 %v138, 1
        %vm144 = vcmp.gt.s32.totalorder %v143, 0
        %v145 = vsel %vm144, %v143, 0
        %v146 = vshrl.u32 %v145, 5
        %v147 = vand.u32 %v145, 31
        %v148 = vsub.s32 32, %v147
        %v149 = vshrl.u32 683565275, %v148
        %v150 = vshll.u32 683565275, %v147
        %v151 = vshrl.u32 2475754826, %v148
        %v152 = vor.u32 %v150, %v151
        %v153 = vshll.u32 2475754826, %v147
        %v154 = vshrl.u32 2131351028, %v148
        %v155 = vor.u32 %v153, %v154
        %v156 = vshll.u32 2131351028, %v147
        %v157 = vshrl.u32 2102212464, %v148
        %v158 = vor.u32 %v156, %v157
        %v159 = vshll.u32 2102212464, %v147
        %v160 = vshrl.u32 920167782, %v148
        %v161 = vor.u32 %v159, %v160
        %v162 = vshll.u32 920167782, %v147
        %v163 = vshrl.u32 1326507024, %v148
        %v164 = vor.u32 %v162, %v163
        %vm165 = vcmp.lt.s32.totalorder %v146, 1
        %vm166 = vcmp.lt.s32.totalorder %v146, 2
        %vm167 = vcmp.lt.s32.totalorder %v146, 3
        %vm168 = vcmp.lt.s32.totalorder %v146, 4
        %v169 = vsel %vm165, %v149, %v152
        %v170 = vsel %vm168, %v158, 2102212464
        %v171 = vsel %vm167, %v155, %v170
        %v172 = vsel %vm166, %v169, %v171
        %v173 = vsel %vm165, %v152, %v155
        %v174 = vsel %vm168, %v161, 920167782
        %v175 = vsel %vm167, %v158, %v174
        %v176 = vsel %vm166, %v173, %v175
        %v177 = vsel %vm165, %v155, %v158
        %v178 = vsel %vm168, %v164, 1326507024
        %v179 = vsel %vm167, %v161, %v178
        %v180 = vsel %vm166, %v177, %v179
        %v181 = vshll.u32 %v141, 8
        %v182 = vmul.u32.u64.compose %v181, %v180
        %v183 = vextract.low.u32 %v182
        %v184 = vextract.high.u32 %v182
        %v185 = vmul.u32.u64.compose %v181, %v176
        %v186 = vextract.low.u32 %v185
        %v187 = vextract.high.u32 %v185
        %v188 = vmul.u32 %v181, %v172
        %v189 = vadd.s32 %v184, %v186
        %vm190 = vc.u32 %v184, %v186
        %v191 = vadd.s32 %v187, 1
        %v192 = vsel %vm190, %v191, %v187
        %v193 = vadd.s32 %v188, %v192
        %v194 = vadd.s32 %v193, 536870912
        %v195 = vshrl.u32 %v194, 30
        %v196 = vshll.u32 %v195, 30
        %v197 = vsub.s32 %v193, %v196
        %vm198 = vcmp.lt.s32.totalorder %v197, 0
        %v199 = vsub.s32 0, %v197
        %v200 = vsel %vm198, %v199, %v197
        %v201 = vclz %v200
        %v202 = vsub.s32 %v201, 2
        %vm203 = vcmp.gt.s32.totalorder 0, %v202
        %v204 = vsel %vm203, 0, %v202
        %v205 = vsub.s32 32, %v204
        %v206 = vshll.u32 %v197, %v204
        %v207 = vshrl.u32 %v189, %v205
        %v208 = vor.u32 %v206, %v207
        %v209 = vsub.s32 4294967266, %v204
        %v210 = vadd.s32 %v209, 127
        %v211 = vshll.u32 %v210, 23
        %v212 = vor.u32 4788187, %v211
        %v213 = vand.u32 2147483647, %v212
        %v215 = vcvt.s32.f32 %v208
        %v216 = vmul.f32 %v215, %v213
        %v217 = vxor.u32 %v216, 2147483648
        %v218 = vsel %vm135, %v217, %v216
        %v219 = vsub.s32 4, %v195
        %v220 = vsel %vm135, %v219, %v195
        %v221 = vsel %vm134, %v132, %v218
        %v222 = vsel %vm134, 0, %v220
        %v223 = vcosq.f32.pop %v221
        %v224 = vsinq.f32.pop %v221
        %vm225 = vweird.f32 %v132
        %v226 = vadd.s32 %v222, 3
        %v227 = vand.u32 %v226, 3
        %vm228 = vcmp.lt.s32.totalorder %v227, 2
        %vm229 = vcmp.eq.s32.totalorder %v227, 0
        %v230 = vxor.u32 %v224, 2147483648
        %v231 = vsel %vm229, %v223, %v230
        %vm232 = vcmp.eq.s32.totalorder %v227, 2
        %v233 = vxor.u32 %v223, 2147483648
        %v234 = vsel %vm232, %v233, %v224
        %v235 = vsel %vm228, %v231, %v234
        %v236 = vsel %vm225, nan, %v235
        %v237 = vand.u32 2147483647, %v132
        %vm238 = vcmp.le.f32.partialorder %v237, 0.7853982
        %vm239 = vcmp.lt.s32.totalorder %v132, 0
        %v240 = vand.u32 %v132, 2139095040
        %v241 = vshrl.u32 %v240, 23
        %v242 = vsub.s32 %v241, 127
        %v243 = vand.u32 2147483647, %v132
        %v244 = vand.u32 %v243, 8388607
        %v245 = vor.u32 %v244, 8388608
        %v246 = vsub.s32 0, %v245
        %v247 = vadd.s32 %v242, 1
        %vm248 = vcmp.gt.s32.totalorder %v247, 0
        %v249 = vsel %vm248, %v247, 0
        %v250 = vshrl.u32 %v249, 5
        %v251 = vand.u32 %v249, 31
        %v252 = vsub.s32 32, %v251
        %v253 = vshrl.u32 683565275, %v252
        %v254 = vshll.u32 683565275, %v251
        %v255 = vshrl.u32 2475754826, %v252
        %v256 = vor.u32 %v254, %v255
        %v257 = vshll.u32 2475754826, %v251
        %v258 = vshrl.u32 2131351028, %v252
        %v259 = vor.u32 %v257, %v258
        %v260 = vshll.u32 2131351028, %v251
        %v261 = vshrl.u32 2102212464, %v252
        %v262 = vor.u32 %v260, %v261
        %v263 = vshll.u32 2102212464, %v251
        %v264 = vshrl.u32 920167782, %v252
        %v265 = vor.u32 %v263, %v264
        %v266 = vshll.u32 920167782, %v251
        %v267 = vshrl.u32 1326507024, %v252
        %v268 = vor.u32 %v266, %v267
        %vm269 = vcmp.lt.s32.totalorder %v250, 1
        %vm270 = vcmp.lt.s32.totalorder %v250, 2
        %vm271 = vcmp.lt.s32.totalorder %v250, 3
        %vm272 = vcmp.lt.s32.totalorder %v250, 4
        %v273 = vsel %vm269, %v253, %v256
        %v274 = vsel %vm272, %v262, 2102212464
        %v275 = vsel %vm271, %v259, %v274
        %v276 = vsel %vm270, %v273, %v275
        %v277 = vsel %vm269, %v256, %v259
        %v278 = vsel %vm272, %v265, 920167782
        %v279 = vsel %vm271, %v262, %v278
        %v280 = vsel %vm270, %v277, %v279
        %v281 = vsel %vm269, %v259, %v262
        %v282 = vsel %vm272, %v268, 1326507024
        %v283 = vsel %vm271, %v265, %v282
        %v284 = vsel %vm270, %v281, %v283
        %v285 = vshll.u32 %v245, 8
        %v286 = vmul.u32.u64.compose %v285, %v284
        %v287 = vextract.low.u32 %v286
        %v288 = vextract.high.u32 %v286
        %v289 = vmul.u32.u64.compose %v285, %v280
        %v290 = vextract.low.u32 %v289
        %v291 = vextract.high.u32 %v289
        %v292 = vmul.u32 %v285, %v276
        %v293 = vadd.s32 %v288, %v290
        %vm294 = vc.u32 %v288, %v290
        %v295 = vadd.s32 %v291, 1
        %v296 = vsel %vm294, %v295, %v291
        %v297 = vadd.s32 %v292, %v296
        %v298 = vadd.s32 %v297, 536870912
        %v299 = vshrl.u32 %v298, 30
        %v300 = vshll.u32 %v299, 30
        %v301 = vsub.s32 %v297, %v300
        %vm302 = vcmp.lt.s32.totalorder %v301, 0
        %v303 = vsub.s32 0, %v301
        %v304 = vsel %vm302, %v303, %v301
        %v305 = vclz %v304
        %v306 = vsub.s32 %v305, 2
        %vm307 = vcmp.gt.s32.totalorder 0, %v306
        %v308 = vsel %vm307, 0, %v306
        %v309 = vsub.s32 32, %v308
        %v310 = vshll.u32 %v301, %v308
        %v311 = vshrl.u32 %v293, %v309
        %v312 = vor.u32 %v310, %v311
        %v313 = vsub.s32 4294967266, %v308
        %v314 = vadd.s32 %v313, 127
        %v315 = vshll.u32 %v314, 23
        %v316 = vor.u32 4788187, %v315
        %v317 = vand.u32 2147483647, %v316
        %v319 = vcvt.s32.f32 %v312
        %v320 = vmul.f32 %v319, %v317
        %v321 = vxor.u32 %v320, 2147483648
        %v322 = vsel %vm239, %v321, %v320
        %v323 = vsub.s32 4, %v299
        %v324 = vsel %vm239, %v323, %v299
        %v325 = vsel %vm238, %v132, %v322
        %v326 = vsel %vm238, 0, %v324
        %v327 = vcosq.f32.pop %v325
        %v328 = vsinq.f32.pop %v325
        %vm329 = vweird.f32 %v132
        %v330 = vand.u32 %v326, 3
        %vm331 = vcmp.lt.s32.totalorder %v330, 2
        %vm332 = vcmp.eq.s32.totalorder %v330, 0
        %v333 = vxor.u32 %v328, 2147483648
        %v334 = vsel %vm332, %v327, %v333
        %vm335 = vcmp.eq.s32.totalorder %v330, 2
        %v336 = vxor.u32 %v327, 2147483648
        %v337 = vsel %vm335, %v336, %v328
        %v338 = vsel %vm331, %v334, %v337
        %v339 = vsel %vm329, nan, %v338
        %v340 = vmul.f32 %v236, 2.0
        %v341 = vmul.f32 %v340, %v339
        %v342 = vmul.f32 %v339, 2.0
        %v343 = vmul.f32 %v342, %v339
        %v344 = vsub.f32 %v343, 1.0
        %v345 = vmul.f32 %v341, 2.0
        %v346 = vmul.f32 %v345, %v344
        %v347 = vmul.f32 %v344, 2.0
        %v348 = vmul.f32 %v347, %v344
        %v349 = vsub.f32 %v348, 1.0
        %v350 = vmul.f32 %v346, 2.0
        %v351 = vmul.f32 %v350, %v349
        %v352 = vmul.f32 %v349, 2.0
        %v353 = vmul.f32 %v352, %v349
        %v354 = vsub.f32 %v353, 1.0
        %356 = vrot.lane.b32.xlu0 %v236, 32
        %v357 = vpop.permute.xlu0 %356
        %360 = vrot.lane.b32.xlu0 %v339, 64
        %v361 = vpop.permute.xlu0 %360
        %364 = vrot.lane.b32.xlu0 %v341, 96
        %v365 = vpop.permute.xlu0 %364
        %vm367 = vcmask 261120
        %v368 = vsel %vm367, %v132, %v357
        %vm369 = vcmask 523264
        %v370 = vsel %vm369, %v368, %v361
        %vm371 = vcmask 785408
        %v372 = vsel %vm371, %v370, %v365
        %373 = vst [vmem:[%s131] sm:$0xff] %v372
        %375 = vrot.lane.b32.xlu0 %v346, 32
        %v376 = vpop.permute.xlu0 %375
        %379 = vrot.lane.b32.xlu0 %v349, 64
        %v380 = vpop.permute.xlu0 %379
        %383 = vrot.lane.b32.xlu0 %v351, 96
        %v384 = vpop.permute.xlu0 %383
        %v386 = vsel %vm367, %v344, %v376
        %v387 = vsel %vm369, %v386, %v380
        %v388 = vsel %vm371, %v387, %v384
        %389 = vst [vmem:[%s131 + $0x8] sm:$0xff] %v388
        %390 = vst.msk [vmem:[%s131 + $0x10] sm:$0xff] %vm367, %v354
        %s391 = sand.u32 %s52, 1
        %s392 = scalar_lea.sflag [#allocation4], %s391
        %s393 = sand.u32 %s52, 1
        %s394 = smul.addr %s393, 24
        %s395 = scalar_lea.vmem [#allocation5], %s394
        // Predicated region
        $region29: #{tpu_custom_call.1} parent=23 // pred_check
          %p396 = pneg %p62
        $region30: #{tpu_custom_call.1} parent=23 // pred_check_branch
          %398 = sbr.rel (%p396) target = $region32
        $region31: #{tpu_custom_call.1} parent=23 // pred_region
          %s400 = ssub.s32 384, 384
          %401 = vsyncadd %s392, %s400
          %s402 = smul.addr %s18, 3
          %s403 = smul.addr %s402, 128
          %s404 = scalar_lea.hbm %s1, %s403
          %s406 = sshll.u32 %s395, 4
          %s407 = int_to_ptr.vmem [resolvable:$true] %s406
          %409 = dma.vmem_to_hbm [thread:$0]  %s407, 384, %s404, %s392
        $region32: #{tpu_custom_call.1} parent=23 // pred_fallthru
          _
      $region24: #{tpu_custom_call.1} parent=5 // pred_fallthru
        _
      %p410 = scmp.le.s32.totalorder 2, %s13
      // Predicated region
      $region33: #{tpu_custom_call.1} parent=5 // pred_check
        %p411 = pneg %p410
      $region34: #{tpu_custom_call.1} parent=5 // pred_check_branch
        %413 = sbr.rel (%p411) target = $region36
      $region35: #{tpu_custom_call.1} parent=5 // pred_region
        %s414 = ssub.s32 %s13, 2
        // Predicated region
        $region37: #{tpu_custom_call.1} parent=35 // pred_check
          %p415 = pneg %p68
        $region38: #{tpu_custom_call.1} parent=35 // pred_check_branch
          %417 = sbr.rel (%p415) target = $region40
        $region39: #{tpu_custom_call.1} parent=35 // pred_region
          %s418 = sand.u32 %s53, 1
          %s419 = scalar_lea.sflag [#allocation4], %s418
          %s420 = sand.u32 %s53, 1
          %s421 = smul.addr %s420, 24
          %s422 = scalar_lea.vmem [#allocation5], %s421
          %423 = dma.done %s419, 384
        $region40: #{tpu_custom_call.1} parent=35 // pred_fallthru
          _
      $region36: #{tpu_custom_call.1} parent=5 // pred_fallthru
        _
    $region6: #{tpu_custom_call.1} parent=1 // loop_footer
      %s17 = sadd.s32 1, %s13
    $region7: #{tpu_custom_call.1} parent=1 // loop_footer_branch
      %12 = sbr.rel target = $region3
    $region8: #{tpu_custom_call.1} parent=1 // loop_exit
      _
    %424 = vsyncpa [#allocation3], 1
    %s425 = scalar_lea.sflag [#allocation3], 1
    %426 = vsyncpa %s425, 1
    %427 = vsyncpa [#allocation4], 1
    %s428 = scalar_lea.sflag [#allocation4], 1
    %429 = vsyncpa %s428, 1

</llo_original>
